<compile_context>
chip_gen: v6e
topology: v6e:2x2x1
jax: 0.10.0
libtpu: 0.0.40
codegen_flags: <defaults>
</compile_context>

<pallas_src>
import jax
import jax.numpy as jnp
from jax import lax
from jax.experimental import pallas as pl
from jax.experimental.pallas import tpu as pltpu

D_MODEL = 64
NUM_HEADS = 8    # unused by the (buggy) 2-D reference path; kept for fidelity
D_OUT = 2
LANE = 128       # lane-tile width; each fused projection block padded to it


def _attn_linear_kernel(x_ref, wqkv_ref, bqkv_ref, out_ref):
    # Whole problem fits in VMEM at these shapes -> single grid point.
    # f32 -> bf16 cast done in-kernel so the wrapper passes raw f32.
    x = x_ref[...].astype(jnp.bfloat16)                                 # (N, D)

    # One fused MXU matmul.  wqkv is lane-aligned: tile 0 = Wq (zero-padded to
    # 128 lanes), tile 1 = Wk, tile 2 = Wv @ Wo (V projection folded into the
    # final Linear).  Biases are folded the same way (bv @ Wo + bo in tile 2).
    qkv = jnp.dot(x, wqkv_ref[...],
                  preferred_element_type=jnp.float32) + bqkv_ref[...]    # (N, 384) f32
    q  = qkv[:, 0 * LANE:1 * LANE]      # (N, 128), real data in lanes [0, 64)
    k  = qkv[:, 1 * LANE:2 * LANE]      # (N, 128), real data in lanes [0, 64)
    vo = qkv[:, 2 * LANE:3 * LANE]      # (N, 128), real data in lanes [0, D_OUT)

    # q @ k^T with the transpose folded into the MXU contraction; zero-padded
    # lanes contribute exactly 0 to the dot product.
    # NOTE: reference applies no 1/sqrt(d_k) scaling; kept as-is.
    s = lax.dot_general(q.astype(jnp.bfloat16), k.astype(jnp.bfloat16),
                        dimension_numbers=(((1,), (1,)), ((), ())),
                        preferred_element_type=jnp.float32)              # (N, N)

    # Softmax in f32 (v5e-safe); reciprocal on the EUP slot (approx vrcp).
    s = s - jnp.max(s, axis=-1, keepdims=True)
    e = jnp.exp(s)
    inv_denom = pl.reciprocal(jnp.sum(e, axis=-1, keepdims=True), approx=True)
    p = e * inv_denom
    # TODO(synk): torch.nn.Dropout(p=0.5) is stochastic in train mode; treated
    # as identity here (inference semantics).

    # p @ (x @ Wv @ Wo + bv @ Wo + bo)  ==  (softmax(qk) @ v) @ Wo + bo
    out = jnp.dot(p.astype(jnp.bfloat16), vo.astype(jnp.bfloat16),
                  preferred_element_type=jnp.float32)                    # (N, 128)
    out_ref[...] = out[:, :D_OUT]       # (N, 2) — single masked store, cheap at N=16


def init_params(key, d_model=D_MODEL, d_out=D_OUT):
    """PyTorch-style Linear init; weights stored transposed (in, out)."""
    ks = jax.random.split(key, 8)
    scale = 1.0 / jnp.sqrt(d_model)

    def lin(kw, kb, din, dout):
        w = jax.random.uniform(kw, (din, dout), jnp.float32, -scale, scale)
        b = jax.random.uniform(kb, (1, dout), jnp.float32, -scale, scale)
        return w, b

    wq, bq = lin(ks[0], ks[1], d_model, d_model)
    wk, bk = lin(ks[2], ks[3], d_model, d_model)
    wv, bv = lin(ks[4], ks[5], d_model, d_model)
    wo, bo = lin(ks[6], ks[7], d_model, d_out)

    # Fold V projection into the final Linear (pure weight prep, f32):
    wvo = wv @ wo                        # (D, d_out)
    bvo = bv @ wo + bo                   # (1, d_out)

    # Lane-aligned fused weight: each block occupies its own 128-lane tile.
    wqkv = jnp.zeros((d_model, 3 * LANE), jnp.float32)
    wqkv = wqkv.at[:, 0 * LANE:0 * LANE + d_model].set(wq)
    wqkv = wqkv.at[:, 1 * LANE:1 * LANE + d_model].set(wk)
    wqkv = wqkv.at[:, 2 * LANE:2 * LANE + d_out].set(wvo)

    bqkv = jnp.zeros((1, 3 * LANE), jnp.float32)
    bqkv = bqkv.at[:, 0 * LANE:0 * LANE + d_model].set(bq)
    bqkv = bqkv.at[:, 1 * LANE:1 * LANE + d_model].set(bk)
    bqkv = bqkv.at[:, 2 * LANE:2 * LANE + d_out].set(bvo)

    return dict(wqkv=wqkv.astype(jnp.bfloat16),   # bf16 MXU operand
                bqkv=bqkv)                        # f32 bias (added to f32 acc)


@jax.jit
def model_forward(x, wqkv, bqkv):
    d_model = x.shape[-1]
    n = x.size // d_model
    x2 = x.reshape(n, d_model)           # bitcast under jit; f32 goes straight in

    vmem = pl.BlockSpec(memory_space=pltpu.MemorySpace.VMEM)
    out = pl.pallas_call(
        _attn_linear_kernel,
        out_shape=jax.ShapeDtypeStruct((n, D_OUT), jnp.float32),
        in_specs=[vmem, vmem, vmem],
        out_specs=vmem,
    )(x2, wqkv, bqkv)

    # Reference .view(N, -1, D) on the (no-op-permuted) output -> (N, 1, d_out);
    # bitcast reshape under jit (no extra dispatch).
    # TODO(synk): reference calls .permute(0,2,1,3) on a 2-D tensor (would raise
    # in PyTorch); treated as a no-op here.
    return out.reshape(n, 1, D_OUT)


if __name__ == "__main__":
    key = jax.random.PRNGKey(0)
    k_x, k_p = jax.random.split(key)

    # Small input consistent with the module: (batch=2, seq=8, d_model=64)
    x = jax.random.normal(k_x, (2, 8, D_MODEL), dtype=jnp.float32)
    params = init_params(k_p)

    out = model_forward(x, params["wqkv"], params["bqkv"])
    out = jax.block_until_ready(out)
    assert out.shape == (2 * 8, 1, D_OUT), out.shape
    assert bool(jnp.all(jnp.isfinite(out)))
    print("KERNEL_OK")
</pallas_src>

<mosaic_0001>
module attributes {stable_mosaic.version = 11 : i64} {
  func.func @_attn_linear_kernel(%arg0: memref<16x64xf32, #tpu.memory_space<vmem>>, %arg1: memref<64x384xbf16, #tpu.memory_space<vmem>>, %arg2: memref<1x384xf32, #tpu.memory_space<vmem>>, %arg3: memref<16x2xf32, #tpu.memory_space<vmem>>) attributes {dimension_semantics = [], scalar_prefetch = 0 : i64, scratch_operands = 0 : i64, tpu.core_type = #tpu.core_type<tc>} {
    %c0 = arith.constant 0 : index
    %c0_0 = arith.constant 0 : index
    %0 = vector.load %arg0[%c0, %c0_0] : memref<16x64xf32, #tpu.memory_space<vmem>>, vector<16x64xf32>
    %1 = arith.truncf %0 : vector<16x64xf32> to vector<16x64xbf16>
    %c0_1 = arith.constant 0 : index
    %c0_2 = arith.constant 0 : index
    %2 = vector.load %arg1[%c0_1, %c0_2] : memref<64x384xbf16, #tpu.memory_space<vmem>>, vector<64x384xbf16>
    %cst = arith.constant dense<0.000000e+00> : vector<16x384xf32>
    %3 = tpu.matmul %1, %2, %cst {dimension_numbers = #tpu.dot_dimension_numbers<[1], [0], [0], [1], [0, 0, 1, 1], [], []>} : vector<16x64xbf16>, vector<64x384xbf16>, vector<16x384xf32> -> vector<16x384xf32>
    %c0_3 = arith.constant 0 : index
    %c0_4 = arith.constant 0 : index
    %4 = vector.load %arg2[%c0_3, %c0_4] : memref<1x384xf32, #tpu.memory_space<vmem>>, vector<1x384xf32>
    %5 = vector.broadcast %4 : vector<1x384xf32> to vector<16x384xf32>
    %6 = arith.addf %3, %5 : vector<16x384xf32>
    %7 = vector.extract_strided_slice %6 {offsets = [0, 0], sizes = [16, 128], strides = [1, 1]} : vector<16x384xf32> to vector<16x128xf32>
    %8 = vector.extract_strided_slice %6 {offsets = [0, 128], sizes = [16, 128], strides = [1, 1]} : vector<16x384xf32> to vector<16x128xf32>
    %9 = vector.extract_strided_slice %6 {offsets = [0, 256], sizes = [16, 128], strides = [1, 1]} : vector<16x384xf32> to vector<16x128xf32>
    %10 = arith.truncf %7 : vector<16x128xf32> to vector<16x128xbf16>
    %11 = arith.truncf %8 : vector<16x128xf32> to vector<16x128xbf16>
    %cst_5 = arith.constant dense<0.000000e+00> : vector<16x16xf32>
    %12 = tpu.matmul %10, %11, %cst_5 {dimension_numbers = #tpu.dot_dimension_numbers<[1], [1], [0], [0], [0, 0, 1, 0], [], []>} : vector<16x128xbf16>, vector<16x128xbf16>, vector<16x16xf32> -> vector<16x16xf32>
    %cst_6 = arith.constant dense<0xFF800000> : vector<16xf32>
    %13 = vector.multi_reduction <maximumf>, %12, %cst_6 [1] : vector<16x16xf32> to vector<16xf32>
    %14 = vector.shape_cast %13 : vector<16xf32> to vector<16x1xf32>
    %15 = vector.broadcast %14 : vector<16x1xf32> to vector<16x16xf32>
    %16 = arith.subf %12, %15 : vector<16x16xf32>
    %17 = math.exp %16 : vector<16x16xf32>
    %cst_7 = arith.constant dense<0.000000e+00> : vector<16xf32>
    %18 = vector.multi_reduction <add>, %17, %cst_7 [1] : vector<16x16xf32> to vector<16xf32>
    %19 = vector.shape_cast %18 : vector<16xf32> to vector<16x1xf32>
    %20 = tpu.reciprocal %19 {approx = true} : vector<16x1xf32> -> vector<16x1xf32>
    %21 = vector.broadcast %20 : vector<16x1xf32> to vector<16x16xf32>
    %22 = arith.mulf %17, %21 : vector<16x16xf32>
    %23 = arith.truncf %22 : vector<16x16xf32> to vector<16x16xbf16>
    %24 = arith.truncf %9 : vector<16x128xf32> to vector<16x128xbf16>
    %cst_8 = arith.constant dense<0.000000e+00> : vector<16x128xf32>
    %25 = tpu.matmul %23, %24, %cst_8 {dimension_numbers = #tpu.dot_dimension_numbers<[1], [0], [0], [1], [0, 0, 1, 1], [], []>} : vector<16x16xbf16>, vector<16x128xbf16>, vector<16x128xf32> -> vector<16x128xf32>
    %26 = vector.extract_strided_slice %25 {offsets = [0, 0], sizes = [16, 2], strides = [1, 1]} : vector<16x128xf32> to vector<16x2xf32>
    %c0_9 = arith.constant 0 : index
    %c0_10 = arith.constant 0 : index
    %27 = vector.load %arg3[%c0_9, %c0_10] : memref<16x2xf32, #tpu.memory_space<vmem>>, vector<16x2xf32>
    tpu.vector_store %arg3[%c0_9, %c0_10], %26 {strides = array<i32>} : memref<16x2xf32, #tpu.memory_space<vmem>>, vector<16x2xf32>,
    return
  }
}

</mosaic_0001>

<llo_original>
// kernel: model_forward.1
$region0: #{model_forward.1}
  #allocation0 [shape = 'u32[]', space=smem, size = 0x4, offset = 0x4, fixed_abs, tag = 'smem constant byte address 0x4 - core index']
  #allocation1 [shape = 'u32[144,128]{1,0:T(1,128)}', space=vmem, size = 0x12000, scoped, tag = 'internal scratch']
  %s0 = inlined_call_operand.hbm [shape: f32[16,64], index: 0, kind: input, shape index: {}]
  %s1 = inlined_call_operand.hbm [shape: bf16[64,384], index: 1, kind: input, shape index: {}]
  %s2 = inlined_call_operand.vmem [shape: f32[1,384], index: 2, kind: input, shape index: {}]
  %s3 = inlined_call_operand.vmem [shape: f32[16,2], index: 3, kind: output, shape index: {}]
  %s4 = sld [smem:[#allocation0]]
  $region30: #{model_forward.1} parent=0
    _
  %s6 = ssub.s32 1, %s4
  %s7 = scalar_select 0, %s6, %s4
  $region1: #{model_forward.1} parent=0
    #allocation2 [shape = 'u8[8192]{0}', space=vmem, size = 0x2000, scoped, tag = 'input window, operand 0, single buffered']
    #allocation3 [shape = 's32[1]{0}', space=sflag, size = 0x4, scoped, tag = 'scoped memory for model_forward.1']
    #allocation4 [shape = 'u8[49152]{0}', space=vmem, size = 0xc000, scoped, tag = 'input window, operand 1, single buffered']
    #allocation5 [shape = 's32[1]{0}', space=sflag, size = 0x4, scoped, tag = 'scoped memory for model_forward.1']
    %8 = vsyncpa [#allocation3], 0
    %9 = vsyncpa [#allocation5], 0
    // Predicated region
    $region2: #{model_forward.1} parent=1 // pred_check
      _
    $region3: #{model_forward.1} parent=1 // pred_check_branch
      %11 = sbr.rel (0) target = $region5
    $region4: #{model_forward.1} parent=1 // pred_region
      %s13 = ssub.s32 256, 256
      %14 = vsyncadd [#allocation3], %s13
      %s15 = sshll.u32 [#allocation2], 4
      %s16 = int_to_ptr.vmem [resolvable:$true] %s15
      %21 = dma.hbm_to_vmem [thread:$0]  %s0, 256, %s16, [#allocation3], 128, 128, 8
    $region5: #{model_forward.1} parent=1 // pred_fallthru
      _
    // Predicated region
    $region6: #{model_forward.1} parent=1 // pred_check
      _
    $region7: #{model_forward.1} parent=1 // pred_check_branch
      %23 = sbr.rel (0) target = $region9
    $region8: #{model_forward.1} parent=1 // pred_region
      %s25 = ssub.s32 1536, 1536
      %26 = vsyncadd [#allocation5], %s25
      %s27 = sshll.u32 [#allocation4], 4
      %s28 = int_to_ptr.vmem [resolvable:$true] %s27
      %33 = dma.hbm_to_vmem [thread:$0]  %s1, 1536, %s28, [#allocation5], 192, 192, 12
    $region9: #{model_forward.1} parent=1 // pred_fallthru
      _
    // Predicated region
    $region10: #{model_forward.1} parent=1 // pred_check
      _
    $region11: #{model_forward.1} parent=1 // pred_check_branch
      %35 = sbr.rel (0) target = $region13
    $region12: #{model_forward.1} parent=1 // pred_region
      _
    $region13: #{model_forward.1} parent=1 // pred_fallthru
      _
    // Predicated region
    $region14: #{model_forward.1} parent=1 // pred_check
      _
    $region15: #{model_forward.1} parent=1 // pred_check_branch
      %37 = sbr.rel (0) target = $region17
    $region16: #{model_forward.1} parent=1 // pred_region
      %38 = dma.done [#allocation3], 256
    $region17: #{model_forward.1} parent=1 // pred_fallthru
      _
    // Predicated region
    $region18: #{model_forward.1} parent=1 // pred_check
      _
    $region19: #{model_forward.1} parent=1 // pred_check_branch
      %40 = sbr.rel (0) target = $region21
    $region20: #{model_forward.1} parent=1 // pred_region
      %41 = dma.done [#allocation5], 1536
    $region21: #{model_forward.1} parent=1 // pred_fallthru
      _
    %v43 = vld [vmem:[#allocation2] sm:$0xff]
    %v44 = vld [vmem:[#allocation2 + $0x8] sm:$0xff]
    %v45 = vpack.c.bf16 %v44, %v43
    %v46 = vld [vmem:[#allocation4] sm:$0xff]
    %v47 = vld [vmem:[#allocation4 + $0x8] sm:$0xf]
    %v48 = vld [vmem:[#allocation4 + $0xc] sm:$0xff]
    %v49 = vld [vmem:[#allocation4 + $0x14] sm:$0xf]
    %v50 = vld [vmem:[#allocation4 + $0x18] sm:$0xff]
    %v51 = vld [vmem:[#allocation4 + $0x20] sm:$0xf]
    %v52 = vld [vmem:[#allocation4 + $0x24] sm:$0xff]
    %v53 = vld [vmem:[#allocation4 + $0x2c] sm:$0xf]
    %v54 = vld [vmem:[#allocation4 + $0x30] sm:$0xff]
    %v55 = vld [vmem:[#allocation4 + $0x38] sm:$0xf]
    %v56 = vld [vmem:[#allocation4 + $0x3c] sm:$0xff]
    %v57 = vld [vmem:[#allocation4 + $0x44] sm:$0xf]
    %v58 = vld [vmem:[#allocation4 + $0x48] sm:$0xff]
    %v59 = vld [vmem:[#allocation4 + $0x50] sm:$0xf]
    %v60 = vld [vmem:[#allocation4 + $0x54] sm:$0xff]
    %v61 = vld [vmem:[#allocation4 + $0x5c] sm:$0xf]
    %v62 = vld [vmem:[%s2] sm:$0x7]
    %v64 = vlaneseq
    %v65 = vshrl.u32 %v64, 7
    %v66 = vsub.s32 0, %v65
    %v67 = vrot.slane %v62, %v66
    %v68 = vlaneseq
    %v69 = vshrl.u32 %v68, 7
    %v70 = vsub.s32 1, %v69
    %v71 = vrot.slane %v62, %v70
    %v72 = vlaneseq
    %v73 = vshrl.u32 %v72, 7
    %v74 = vsub.s32 2, %v73
    %v75 = vrot.slane %v62, %v74
    %v95 = vunpack.c.l.b16 %v46
    %v96 = vunpack.c.h.b16 %v46
    %v97 = vunpack.c.l.b16 %v47
    %v98 = vunpack.c.l.b16 %v48
    %v99 = vunpack.c.h.b16 %v48
    %v100 = vunpack.c.l.b16 %v49
    %v101 = vunpack.c.l.b16 %v50
    %v102 = vunpack.c.h.b16 %v50
    %v103 = vunpack.c.l.b16 %v51
    %v104 = vunpack.c.l.b16 %v52
    %v105 = vunpack.c.h.b16 %v52
    %v106 = vunpack.c.l.b16 %v53
    %v107 = vunpack.c.l.b16 %v54
    %v108 = vunpack.c.h.b16 %v54
    %v109 = vunpack.c.l.b16 %v55
    %v110 = vunpack.c.l.b16 %v56
    %v111 = vunpack.c.h.b16 %v56
    %v112 = vunpack.c.l.b16 %v57
    %v113 = vunpack.c.l.b16 %v58
    %v114 = vunpack.c.h.b16 %v58
    %v115 = vunpack.c.l.b16 %v59
    %v116 = vunpack.c.l.b16 %v60
    %v117 = vunpack.c.h.b16 %v60
    %v118 = vunpack.c.l.b16 %v61
    %v119 = vpack.c.b16 %v98, %v95
    %v120 = vpack.c.b16 %v99, %v96
    %v121 = vpack.c.b16 %v100, %v97
    %v122 = vpack.c.b16 %v104, %v101
    %v123 = vpack.c.b16 %v105, %v102
    %v124 = vpack.c.b16 %v106, %v103
    %v125 = vpack.c.b16 %v110, %v107
    %v126 = vpack.c.b16 %v111, %v108
    %v127 = vpack.c.b16 %v112, %v109
    %v128 = vpack.c.b16 %v116, %v113
    %v129 = vpack.c.b16 %v117, %v114
    %v130 = vpack.c.b16 %v118, %v115
    %vm143 = vcmask 523264
    %v145 = vsel %vm143, %v45, 0
    %147 = vmatprep.subr.bf16.mxu0 0
    %148 = vmatpush1.bf16.msra.mxu0 0
    %149 = vmatprep.subr.bf16.mxu0 0
    %150 = vmatpush1.bf16.msra.mxu0 0
    %151 = vmatprep.subr.bf16.mxu0 0
    %152 = vmatpush1.bf16.msra.mxu0 0
    %153 = vmatprep.subr.bf16.mxu0 0
    %154 = vmatpush1.bf16.msra.mxu0 0
    %155 = vmatprep.subr.bf16.mxu0 %v129
    %156 = vmatpush1.bf16.msra.mxu0 %v128
    %157 = vmatprep.subr.bf16.mxu0 %v126
    %158 = vmatpush1.bf16.msra.mxu0 %v125
    %159 = vmatprep.subr.bf16.mxu0 %v123
    %160 = vmatpush1.bf16.msra.mxu0 %v122
    %161 = vmatprep.subr.bf16.mxu0 %v120
    %162 = vmatpush1.bf16.msra.mxu0 %v119
    %163 = vmatprep.subr.bf16.mxu0 0
    %164 = vmatpush2.bf16.msra.mxu0 0
    %165 = vmatprep.subr.bf16.mxu0 0
    %166 = vmatpush2.bf16.msra.mxu0 0
    %167 = vmatprep.subr.bf16.mxu0 0
    %168 = vmatpush2.bf16.msra.mxu0 0
    %169 = vmatprep.subr.bf16.mxu0 0
    %170 = vmatpush2.bf16.msra.mxu0 0
    %171 = vmatprep.subr.bf16.mxu0 0
    %172 = vmatpush2.bf16.msra.mxu0 0
    %173 = vmatprep.subr.bf16.mxu0 0
    %174 = vmatpush2.bf16.msra.mxu0 0
    %175 = vmatprep.subr.bf16.mxu0 0
    %176 = vmatpush2.bf16.msra.mxu0 0
    %177 = vmatprep.subr.bf16.mxu0 0
    %178 = vmatpush2.bf16.msra.mxu0 0
    %179 = vmatprep.mubr.bf16.mxu0 0
    %180 = vmatmul.mubr.bf16.gmra.mxu0 %v145
    %v181 = vpop.f32.mrf.mxu0
    %v182 = vadd.f32 %v67, %v181
    %v183 = vpop.f32.mrf.mxu0
    %v184 = vadd.f32 %v71, %v183
    %v185 = vpop.f32.mrf.mxu0
    %v186 = vadd.f32 %v67, %v185
    %v187 = vpop.f32.mrf.mxu0
    %v188 = vadd.f32 %v71, %v187
    %189 = vdwg.mxu0
    %190 = vmatprep.subr.bf16.mxu0 0
    %191 = vmatpush1.bf16.msra.mxu0 0
    %192 = vmatprep.subr.bf16.mxu0 0
    %193 = vmatpush1.bf16.msra.mxu0 0
    %194 = vmatprep.subr.bf16.mxu0 0
    %195 = vmatpush1.bf16.msra.mxu0 0
    %196 = vmatprep.subr.bf16.mxu0 0
    %197 = vmatpush1.bf16.msra.mxu0 0
    %198 = vmatprep.subr.bf16.mxu0 0
    %199 = vmatpush1.bf16.msra.mxu0 %v130
    %200 = vmatprep.subr.bf16.mxu0 0
    %201 = vmatpush1.bf16.msra.mxu0 %v127
    %202 = vmatprep.subr.bf16.mxu0 0
    %203 = vmatpush1.bf16.msra.mxu0 %v124
    %204 = vmatprep.subr.bf16.mxu0 0
    %205 = vmatpush1.bf16.msra.mxu0 %v121
    %206 = vmatprep.subr.bf16.mxu0 0
    %207 = vmatpush2.bf16.msra.mxu0 0
    %208 = vmatprep.subr.bf16.mxu0 0
    %209 = vmatpush2.bf16.msra.mxu0 0
    %210 = vmatprep.subr.bf16.mxu0 0
    %211 = vmatpush2.bf16.msra.mxu0 0
    %212 = vmatprep.subr.bf16.mxu0 0
    %213 = vmatpush2.bf16.msra.mxu0 0
    %214 = vmatprep.subr.bf16.mxu0 0
    %215 = vmatpush2.bf16.msra.mxu0 0
    %216 = vmatprep.subr.bf16.mxu0 0
    %217 = vmatpush2.bf16.msra.mxu0 0
    %218 = vmatprep.subr.bf16.mxu0 0
    %219 = vmatpush2.bf16.msra.mxu0 0
    %220 = vmatprep.subr.bf16.mxu0 0
    %221 = vmatpush2.bf16.msra.mxu0 0
    %222 = vmatprep.mubr.bf16.mxu0 0
    %223 = vmatmul.mubr.bf16.gmra.mxu0 %v145
    %v224 = vpop.f32.mrf.mxu0
    %v225 = vadd.f32 %v75, %v224
    %v226 = vpop.f32.mrf.mxu0
    %v227 = vpop.f32.mrf.mxu0
    %v228 = vadd.f32 %v75, %v227
    %v229 = vpop.f32.mrf.mxu0
    %230 = vdwg.mxu0
    %v231 = vpack.c.bf16 %v186, %v182
    %v232 = vpack.c.bf16 %v188, %v184
    %233 = vmatprep.subr.bf16.mxu0 0
    %234 = vmatpush1.bf16.xpose.msra.mxu0 0
    %235 = vmatprep.subr.bf16.mxu0 0
    %236 = vmatpush1.bf16.xpose.msra.mxu0 0
    %237 = vmatprep.subr.bf16.mxu0 0
    %238 = vmatpush1.bf16.xpose.msra.mxu0 0
    %239 = vmatprep.subr.bf16.mxu0 0
    %240 = vmatpush1.bf16.xpose.msra.mxu0 0
    %241 = vmatprep.subr.bf16.mxu0 0
    %242 = vmatpush1.bf16.xpose.msra.mxu0 0
    %243 = vmatprep.subr.bf16.mxu0 0
    %244 = vmatpush1.bf16.xpose.msra.mxu0 0
    %245 = vmatprep.subr.bf16.mxu0 0
    %246 = vmatpush1.bf16.xpose.msra.mxu0 0
    %247 = vmatprep.subr.bf16.mxu0 0
    %248 = vmatpush1.bf16.xpose.msra.mxu0 %v232
    %249 = vmatprep.subr.bf16.mxu0 0
    %250 = vmatpush2.bf16.xpose.msra.mxu0 0
    %251 = vmatprep.subr.bf16.mxu0 0
    %252 = vmatpush2.bf16.xpose.msra.mxu0 0
    %253 = vmatprep.subr.bf16.mxu0 0
    %254 = vmatpush2.bf16.xpose.msra.mxu0 0
    %255 = vmatprep.subr.bf16.mxu0 0
    %256 = vmatpush2.bf16.xpose.msra.mxu0 0
    %257 = vmatprep.subr.bf16.mxu0 0
    %258 = vmatpush2.bf16.xpose.msra.mxu0 0
    %259 = vmatprep.subr.bf16.mxu0 0
    %260 = vmatpush2.bf16.xpose.msra.mxu0 0
    %261 = vmatprep.subr.bf16.mxu0 0
    %262 = vmatpush2.bf16.xpose.msra.mxu0 0
    %263 = vmatprep.subr.bf16.mxu0 0
    %264 = vmatpush2.bf16.xpose.msra.mxu0 0
    %265 = vmatprep.mubr.bf16.mxu0 0
    %266 = vmatmul.mubr.bf16.gmra.mxu0 %v231
    %v267 = vpop.f32.mrf.mxu0
    %v268 = vadd.f32 0.0, %v267
    %v269 = vpop.f32.mrf.mxu0
    %v270 = vpop.f32.mrf.mxu0
    %v271 = vadd.f32 0.0, %v270
    %v272 = vpop.f32.mrf.mxu0
    %273 = vdwg.mxu0
    %vm274 = vcmask 130048
    %v275 = vsel %vm274, %v268, -inf
    %276 = vmax.xlane.f32.xlu0 %v275
    %v277 = vpop.xlane.xlu0 %276
    %v278 = vsel %vm274, %v271, -inf
    %279 = vmax.xlane.f32.xlu0 %v278
    %v280 = vpop.xlane.xlu0 %279
    %v281 = vsub.f32 %v268, %v277
    %v282 = vsub.f32 %v271, %v280
    %v283 = vmul.f32 %v281, 1.442695
    %v284 = vpow.pop %v283
    %v285 = vmul.f32 %v282, 1.442695
    %v286 = vpow.pop %v285
    %v287 = vsel %vm274, %v284, 0.0
    %288 = vadd.xlane.f32.xlu0 %v287
    %v289 = vpop.xlane.xlu0 %288
    %v290 = vsel %vm274, %v286, 0.0
    %291 = vadd.xlane.f32.xlu0 %v290
    %v292 = vpop.xlane.xlu0 %291
    %v293 = vrcp.pop %v289
    %v294 = vrcp.pop %v292
    %v295 = vmul.f32 %v284, %v293
    %v296 = vmul.f32 %v286, %v294
    %v297 = vpack.c.bf16 %v296, %v295
    %v298 = vpack.c.bf16 %v228, %v225
    %v300 = vsel %vm274, %v297, 0
    %302 = vmatprep.subr.bf16.mxu0 0
    %303 = vmatpush1.bf16.msra.mxu0 0
    %304 = vmatprep.subr.bf16.mxu0 0
    %305 = vmatpush1.bf16.msra.mxu0 0
    %306 = vmatprep.subr.bf16.mxu0 0
    %307 = vmatpush1.bf16.msra.mxu0 0
    %308 = vmatprep.subr.bf16.mxu0 0
    %309 = vmatpush1.bf16.msra.mxu0 0
    %310 = vmatprep.subr.bf16.mxu0 0
    %311 = vmatpush1.bf16.msra.mxu0 0
    %312 = vmatprep.subr.bf16.mxu0 0
    %313 = vmatpush1.bf16.msra.mxu0 0
    %314 = vmatprep.subr.bf16.mxu0 0
    %315 = vmatpush1.bf16.msra.mxu0 0
    %316 = vmatprep.subr.bf16.mxu0 0
    %317 = vmatpush1.bf16.msra.mxu0 %v298
    %318 = vmatprep.subr.bf16.mxu0 0
    %319 = vmatpush2.bf16.msra.mxu0 0
    %320 = vmatprep.subr.bf16.mxu0 0
    %321 = vmatpush2.bf16.msra.mxu0 0
    %322 = vmatprep.subr.bf16.mxu0 0
    %323 = vmatpush2.bf16.msra.mxu0 0
    %324 = vmatprep.subr.bf16.mxu0 0
    %325 = vmatpush2.bf16.msra.mxu0 0
    %326 = vmatprep.subr.bf16.mxu0 0
    %327 = vmatpush2.bf16.msra.mxu0 0
    %328 = vmatprep.subr.bf16.mxu0 0
    %329 = vmatpush2.bf16.msra.mxu0 0
    %330 = vmatprep.subr.bf16.mxu0 0
    %331 = vmatpush2.bf16.msra.mxu0 0
    %332 = vmatprep.subr.bf16.mxu0 0
    %333 = vmatpush2.bf16.msra.mxu0 0
    %334 = vmatprep.mubr.bf16.mxu0 0
    %335 = vmatmul.mubr.bf16.gmra.mxu0 %v300
    %v336 = vpop.f32.mrf.mxu0
    %v337 = vadd.f32 0.0, %v336
    %v338 = vpop.f32.mrf.mxu0
    %v339 = vpop.f32.mrf.mxu0
    %v340 = vadd.f32 0.0, %v339
    %v341 = vpop.f32.mrf.mxu0
    %342 = vdwg.mxu0
    %vm343 = vcmask 15360
    %344 = vst.msk [vmem:[%s3] sm:$0xff] %vm343, %v337
    %345 = vst.msk [vmem:[%s3 + $0x8] sm:$0xff] %vm343, %v340
    // Predicated region
    $region22: #{model_forward.1} parent=1 // pred_check
      _
    $region23: #{model_forward.1} parent=1 // pred_check_branch
      %347 = sbr.rel (0) target = $region25
    $region24: #{model_forward.1} parent=1 // pred_region
      _
    $region25: #{model_forward.1} parent=1 // pred_fallthru
      _
    // Predicated region
    $region26: #{model_forward.1} parent=1 // pred_check
      _
    $region27: #{model_forward.1} parent=1 // pred_check_branch
      %349 = sbr.rel (0) target = $region29
    $region28: #{model_forward.1} parent=1 // pred_region
      _
    $region29: #{model_forward.1} parent=1 // pred_fallthru
      _
    %350 = vsyncpa [#allocation3], 1
    %351 = vsyncpa [#allocation5], 1

</llo_original>
